<compile_context>
chip_gen: v5e
topology: v5e:2x2
jax: 0.10.0
libtpu: 0.0.40
codegen_flags: <defaults>
</compile_context>

<pallas_src>
import math

import jax
import jax.numpy as jnp
from jax.experimental import pallas as pl
from jax.experimental.pallas import tpu as pltpu

OMEGA = 10.0
EPSILON = 2.0
INV_EPSILON = 1.0 / EPSILON
LOG_TERM = math.log(1.0 + OMEGA / EPSILON)
C_CONST = OMEGA - OMEGA * LOG_TERM

LANES = 128
SUBLANES = 8
NUM_SPLITS = 2                       # leading "parallel" grid axis (2 TCs on v7x)
ALIGN = NUM_SPLITS * SUBLANES * LANES  # 2048 elements


def _make_wing_sum_kernel(block_rows, inner_rows, need_mask):
    """Builds the per-tile kernel.

    block_rows: rows per tile (multiple of 8, or == inner_rows).
    inner_rows: number of valid rows per split (array's middle dim).
    need_mask:  True iff the last grid block along the row axis is partial.
    """

    def kernel(pred_ref, targ_ref, out_ref):
        i = pl.program_id(1)

        @pl.when(i == 0)
        def _init():
            out_ref[...] = jnp.zeros_like(out_ref)

        d = jnp.abs(targ_ref[...] - pred_ref[...])
        small = OMEGA * jnp.log1p(d * INV_EPSILON)
        large = d - C_CONST
        val = jnp.where(d < OMEGA, small, large)

        if need_mask:
            # Mask rows past the end of the array: Pallas pads partial blocks
            # with unspecified values, which must not reach the sum.
            row = i * block_rows + jax.lax.broadcasted_iota(
                jnp.int32, (block_rows, LANES), 0)
            val = jnp.where(row < inner_rows, val, 0.0)

        # vreg-shaped accumulation: pure VPU adds into the resident (8, 128)
        # output block; the single cross-lane reduction happens on the host.
        out_ref[...] += val.reshape(-1, SUBLANES, LANES).sum(axis=0)

    return kernel


def wing_loss(pred, target, *, block_rows=1024):
    """pred, target: (B, 3, n_points). Returns scalar float32 wing loss."""
    pred = pred.astype(jnp.float32)
    target = target.astype(jnp.float32)
    n_elems = pred.size

    flat_p = pred.reshape(-1)
    flat_t = target.reshape(-1)

    padded = ((n_elems + ALIGN - 1) // ALIGN) * ALIGN
    if padded != n_elems:
        # Only taken when n_elems is not a multiple of 2048.  Zero padding
        # contributes exactly 0 to the wing sum (delta = 0 -> log1p(0) = 0),
        # and the mean still divides by the original n_elems.
        # TODO(synk): a fully copy-free path for misaligned sizes would need a
        # manual-DMA (pl.ANY) gather of the ragged tail.
        pad = padded - n_elems
        flat_p = jnp.pad(flat_p, (0, pad))
        flat_t = jnp.pad(flat_t, (0, pad))

    inner_rows = padded // (NUM_SPLITS * LANES)   # multiple of 8 by construction
    p3 = flat_p.reshape(NUM_SPLITS, inner_rows, LANES)
    t3 = flat_t.reshape(NUM_SPLITS, inner_rows, LANES)

    # Clamp / align the tile height: multiple of 8, no larger than the array.
    block_rows = max(SUBLANES, (int(block_rows) // SUBLANES) * SUBLANES)
    block_rows = min(block_rows, inner_rows)
    inner_grid = pl.cdiv(inner_rows, block_rows)
    need_mask = (inner_rows % block_rows) != 0

    partials = pl.pallas_call(
        _make_wing_sum_kernel(block_rows, inner_rows, need_mask),
        out_shape=jax.ShapeDtypeStruct((NUM_SPLITS, SUBLANES, LANES), jnp.float32),
        grid=(NUM_SPLITS, inner_grid),
        in_specs=[
            pl.BlockSpec((None, block_rows, LANES), lambda p, i: (p, i, 0)),
            pl.BlockSpec((None, block_rows, LANES), lambda p, i: (p, i, 0)),
        ],
        out_specs=pl.BlockSpec((None, SUBLANES, LANES), lambda p, i: (p, 0, 0)),
        compiler_params=pltpu.CompilerParams(
            dimension_semantics=("parallel", "arbitrary"),
        ),
    )(p3, t3)

    total = jnp.sum(partials)
    return (total / jnp.float32(n_elems)).astype(jnp.float32)


def wing_loss_ref(pred, target):
    pred = pred.astype(jnp.float32)
    target = target.astype(jnp.float32)
    d = jnp.abs(target - pred)
    small = OMEGA * jnp.log1p(d / EPSILON)
    large = d - C_CONST
    return jnp.mean(jnp.where(d < OMEGA, small, large))


if __name__ == "__main__":
    key = jax.random.PRNGKey(0)

    # Case 1: tiny, 2048-misaligned shape (exercises the zero-pad path).
    k1, k2, k3, k4 = jax.random.split(key, 4)
    B, n_points = 2, 16
    pred1 = 12.0 * jax.random.normal(k1, (B, 3, n_points), dtype=jnp.float32)
    targ1 = 12.0 * jax.random.normal(k2, (B, 3, n_points), dtype=jnp.float32)
    out1 = wing_loss(pred1, targ1)
    jax.block_until_ready(out1)
    ref1 = wing_loss_ref(pred1, targ1)
    assert jnp.allclose(out1, ref1, rtol=1e-5, atol=1e-5), (out1, ref1)

    # Case 2: 2048-aligned shape (zero-copy path) with a small block_rows so
    # the multi-block inner grid + partial-last-block masking path runs.
    B2, n_points2 = 2, 1024          # 2*3*1024 = 6144 = 3 * 2048 elements
    pred2 = 12.0 * jax.random.normal(k3, (B2, 3, n_points2), dtype=jnp.float32)
    targ2 = 12.0 * jax.random.normal(k4, (B2, 3, n_points2), dtype=jnp.float32)
    out2 = wing_loss(pred2, targ2, block_rows=16)
    jax.block_until_ready(out2)
    ref2 = wing_loss_ref(pred2, targ2)
    assert jnp.allclose(out2, ref2, rtol=1e-5, atol=1e-5), (out2, ref2)

    print("KERNEL_OK")
</pallas_src>

<mosaic_0001>
module attributes {stable_mosaic.version = 11 : i64} {
  func.func @kernel(%arg0: i32, %arg1: i32, %arg2: memref<1x8x128xf32, #tpu.memory_space<vmem>>, %arg3: memref<1x8x128xf32, #tpu.memory_space<vmem>>, %arg4: memref<1x8x128xf32, #tpu.memory_space<vmem>>) attributes {dimension_semantics = [#tpu.dimension_semantics<parallel>, #tpu.dimension_semantics<arbitrary>], iteration_bounds = array<i64: 2, 1>, scalar_prefetch = 0 : i64, scratch_operands = 0 : i64, tpu.core_type = #tpu.core_type<tc>, window_params = [{transform_indices = @transform_0, window_bounds = array<i64: 1, 8, 128>}, {transform_indices = @transform_1, window_bounds = array<i64: 1, 8, 128>}, {transform_indices = @transform_2, window_bounds = array<i64: 1, 8, 128>}]} {
    %c0_i32 = arith.constant 0 : i32
    %0 = arith.cmpi eq, %arg1, %c0_i32 : i32
    %1 = arith.extui %0 : i1 to i32
    %c0_i32_0 = arith.constant 0 : i32
    %2 = arith.cmpi ne, %1, %c0_i32_0 : i32
    scf.if %2 {
      %cst_16 = arith.constant 0.000000e+00 : f32
      %27 = vector.broadcast %cst_16 : f32 to vector<8x128xf32>
      %c0_17 = arith.constant 0 : index
      %c0_18 = arith.constant 0 : index
      %c0_19 = arith.constant 0 : index
      %28 = vector.load %arg4[%c0_17, %c0_18, %c0_19] : memref<1x8x128xf32, #tpu.memory_space<vmem>>, vector<1x8x128xf32>
      %29 = vector.shape_cast %28 : vector<1x8x128xf32> to vector<8x128xf32>
      %30 = vector.shape_cast %27 : vector<8x128xf32> to vector<1x8x128xf32>
      tpu.vector_store %arg4[%c0_17, %c0_18, %c0_19], %30 {strides = array<i32>} : memref<1x8x128xf32, #tpu.memory_space<vmem>>, vector<1x8x128xf32>,
    } else {
    }
    %c0 = arith.constant 0 : index
    %c0_1 = arith.constant 0 : index
    %c0_2 = arith.constant 0 : index
    %3 = vector.load %arg3[%c0, %c0_1, %c0_2] : memref<1x8x128xf32, #tpu.memory_space<vmem>>, vector<1x8x128xf32>
    %4 = vector.shape_cast %3 : vector<1x8x128xf32> to vector<8x128xf32>
    %c0_3 = arith.constant 0 : index
    %c0_4 = arith.constant 0 : index
    %c0_5 = arith.constant 0 : index
    %5 = vector.load %arg2[%c0_3, %c0_4, %c0_5] : memref<1x8x128xf32, #tpu.memory_space<vmem>>, vector<1x8x128xf32>
    %6 = vector.shape_cast %5 : vector<1x8x128xf32> to vector<8x128xf32>
    %7 = arith.subf %4, %6 : vector<8x128xf32>
    %8 = math.absf %7 : vector<8x128xf32>
    %cst = arith.constant 5.000000e-01 : f32
    %9 = vector.broadcast %cst : f32 to vector<8x128xf32>
    %10 = arith.mulf %8, %9 : vector<8x128xf32>
    %11 = math.log1p %10 : vector<8x128xf32>
    %cst_6 = arith.constant 1.000000e+01 : f32
    %12 = vector.broadcast %cst_6 : f32 to vector<8x128xf32>
    %13 = arith.mulf %12, %11 : vector<8x128xf32>
    %cst_7 = arith.constant -7.9175949 : f32
    %14 = vector.broadcast %cst_7 : f32 to vector<8x128xf32>
    %15 = arith.subf %8, %14 : vector<8x128xf32>
    %cst_8 = arith.constant 1.000000e+01 : f32
    %16 = vector.broadcast %cst_8 : f32 to vector<8x128xf32>
    %17 = arith.cmpf olt, %8, %16 : vector<8x128xf32>
    %18 = arith.select %17, %13, %15 : vector<8x128xi1>, vector<8x128xf32>
    %c0_9 = arith.constant 0 : index
    %c0_10 = arith.constant 0 : index
    %c0_11 = arith.constant 0 : index
    %19 = vector.load %arg4[%c0_9, %c0_10, %c0_11] : memref<1x8x128xf32, #tpu.memory_space<vmem>>, vector<1x8x128xf32>
    %20 = vector.shape_cast %19 : vector<1x8x128xf32> to vector<8x128xf32>
    %21 = vector.shape_cast %18 : vector<8x128xf32> to vector<1x8x128xf32>
    %cst_12 = arith.constant dense<0.000000e+00> : vector<8x128xf32>
    %22 = vector.multi_reduction <add>, %21, %cst_12 [0] : vector<1x8x128xf32> to vector<8x128xf32>
    %23 = arith.addf %20, %22 : vector<8x128xf32>
    %c0_13 = arith.constant 0 : index
    %c0_14 = arith.constant 0 : index
    %c0_15 = arith.constant 0 : index
    %24 = vector.load %arg4[%c0_13, %c0_14, %c0_15] : memref<1x8x128xf32, #tpu.memory_space<vmem>>, vector<1x8x128xf32>
    %25 = vector.shape_cast %24 : vector<1x8x128xf32> to vector<8x128xf32>
    %26 = vector.shape_cast %23 : vector<8x128xf32> to vector<1x8x128xf32>
    tpu.vector_store %arg4[%c0_13, %c0_14, %c0_15], %26 {strides = array<i32>} : memref<1x8x128xf32, #tpu.memory_space<vmem>>, vector<1x8x128xf32>,
    return
  }
  func.func @transform_0(%arg0: i32, %arg1: i32) -> (i32, i32, i32) {
    %c0_i32 = arith.constant 0 : i32
    %c0_i32_0 = arith.constant 0 : i32
    return %arg0, %arg1, %c0_i32 : i32, i32, i32
  }
  func.func @transform_1(%arg0: i32, %arg1: i32) -> (i32, i32, i32) {
    %c0_i32 = arith.constant 0 : i32
    %c0_i32_0 = arith.constant 0 : i32
    return %arg0, %arg1, %c0_i32 : i32, i32, i32
  }
  func.func @transform_2(%arg0: i32, %arg1: i32) -> (i32, i32, i32) {
    %c0_i32 = arith.constant 0 : i32
    %c0_i32_0 = arith.constant 0 : i32
    %c0_i32_1 = arith.constant 0 : i32
    return %arg0, %c0_i32, %c0_i32_0 : i32, i32, i32
  }
}

</mosaic_0001>

<llo_original>
// kernel: tpu_custom_call.1
$region0: #{tpu_custom_call.1}
  #allocation0 [shape = 'u32[]', space=smem, size = 0x4, offset = 0x4, fixed_abs, tag = 'smem constant byte address 0x4 - core index']
  #allocation1 [shape = 'u32[72,128]{1,0:T(1,128)}', space=vmem, size = 0x9000, scoped, tag = 'internal scratch']
  %s0 = inlined_call_operand.hbm [shape: f32[2,8,128], index: 0, kind: input, shape index: {}]
  %s1 = inlined_call_operand.hbm [shape: f32[2,8,128], index: 1, kind: input, shape index: {}]
  %s2 = inlined_call_operand.hbm [shape: f32[2,8,128], index: 2, kind: output, shape index: {}]
  %s3 = sld [smem:[#allocation0]]
  $region53: #{tpu_custom_call.1} parent=0
    _
  %s5 = ssub.s32 1, %s3
  %s6 = scalar_select 0, %s5, %s3
  $region1: #{tpu_custom_call.1} parent=0
    #allocation2 [shape = 'u8[8192]{0}', space=vmem, size = 0x2000, scoped, tag = 'input window, operand 0']
    #allocation3 [shape = 's32[2]{0}', space=sflag, size = 0x8, scoped, tag = 'scoped memory for tpu_custom_call.1']
    #allocation4 [shape = 's32[2]{0}', space=sflag, size = 0x8, scoped, tag = 'scoped memory for tpu_custom_call.1']
    #allocation5 [shape = 'u8[8192]{0}', space=vmem, size = 0x2000, scoped, tag = 'input window, operand 1']
    #allocation6 [shape = 's32[2]{0}', space=sflag, size = 0x8, scoped, tag = 'scoped memory for tpu_custom_call.1']
    #allocation7 [shape = 'u8[8192]{0}', space=vmem, size = 0x2000, scoped, tag = 'output window, operand 0']
    %7 = vsyncpa [#allocation3], 0
    %s8 = scalar_lea.sflag [#allocation3], 1
    %9 = vsyncpa %s8, 0
    %10 = vsyncpa [#allocation6], 0
    %s11 = scalar_lea.sflag [#allocation6], 1
    %12 = vsyncpa %s11, 0
    %13 = vsyncpa [#allocation4], 0
    %s14 = scalar_lea.sflag [#allocation4], 1
    %15 = vsyncpa %s14, 0
    loop: start=0, step=1, limit=4
    $region2: #{tpu_custom_call.1} parent=1 // loop_pre_header
      _
    $region3: #{tpu_custom_call.1} parent=1 // loop_header
      %s17 = sphi 0, %s21
      %p18 = scmp.ge.s32.totalorder %s17, 4
      %s24 = sphi 0, %s36
      %s25 = sphi 0, %s32
      %s26 = sphi 0, %s24
      %s27 = sphi 0, %s25
      %s28 = sphi 0, %s26
      %s29 = sphi 0, %s27
      %s41 = sphi 0, %s43
      %s44 = sphi 0, %s41
      %s45 = sphi 0, %s44
      %s61 = sphi 0, %s45
      %s69 = sphi 0, %s71
      %s72 = sphi 0, %s69
      %s73 = sphi 0, %s72
      %s89 = sphi 0, %s73
      %s95 = sphi 0, %s97
      %s98 = sphi 0, %s95
      %s99 = sphi 0, %s98
      %s115 = sphi 0, %s99
    $region4: #{tpu_custom_call.1} parent=1 // loop_header_branch
      %20 = sbr.rel (%p18) target = $region8
    $region5: #{tpu_custom_call.1} parent=1 // loop_body
      %s22 = ssub.s32 %s17, 1
      %s23 = ssub.s32 %s17, 2
      %s30 = sadd.s32 1, %s25
      %p31 = scmp.ge.s32.totalorder %s30, 1
      %s32 = scalar_select %p31, 0, %s30
      %s33 = sadd.s32 1, %s24
      %s34 = scalar_select %p31, %s33, %s24
      %p35 = scmp.ge.s32.totalorder %s34, 2
      %s36 = scalar_select %p35, 0, %s34
      %s37 = ssub.s32 %s24, %s36
      %s38 = ssub.s32 %s25, %s32
      %s39 = sor.u32 %s37, %s38
      %p40 = scmp.eq.s32.totalorder %s39, 0
      %s42 = sadd.s32 %s41, 1
      %s43 = scalar_select %p40, %s41, %s42
      %p46 = pneg %p40
      %p47 = scmp.eq.s32.totalorder %s17, 1
      %p48 = por %p46, %p47
      %p49 = scmp.ne.s32.totalorder %s41, %s44
      %p50 = scmp.eq.s32.totalorder %s17, 0
      %p51 = por %p49, %p50
      %p52 = scmp.ne.s32.totalorder %s41, %s44
      %p53 = scmp.eq.s32.totalorder %s22, 1
      %p54 = por %p52, %p53
      %p55 = scmp.ne.s32.totalorder %s44, %s45
      %p56 = scmp.eq.s32.totalorder %s22, 0
      %p57 = por %p55, %p56
      %p58 = scmp.ne.s32.totalorder %s44, %s45
      %p59 = scmp.eq.s32.totalorder %s23, 1
      %p60 = por %p58, %p59
      %p62 = scmp.ne.s32.totalorder %s45, %s61
      %p63 = scmp.eq.s32.totalorder %s23, 0
      %p64 = por %p62, %p63
      %s65 = ssub.s32 %s24, %s36
      %s66 = ssub.s32 %s25, %s32
      %s67 = sor.u32 %s65, %s66
      %p68 = scmp.eq.s32.totalorder %s67, 0
      %s70 = sadd.s32 %s69, 1
      %s71 = scalar_select %p68, %s69, %s70
      %p74 = pneg %p68
      %p75 = scmp.eq.s32.totalorder %s17, 1
      %p76 = por %p74, %p75
      %p77 = scmp.ne.s32.totalorder %s69, %s72
      %p78 = scmp.eq.s32.totalorder %s17, 0
      %p79 = por %p77, %p78
      %p80 = scmp.ne.s32.totalorder %s69, %s72
      %p81 = scmp.eq.s32.totalorder %s22, 1
      %p82 = por %p80, %p81
      %p83 = scmp.ne.s32.totalorder %s72, %s73
      %p84 = scmp.eq.s32.totalorder %s22, 0
      %p85 = por %p83, %p84
      %p86 = scmp.ne.s32.totalorder %s72, %s73
      %p87 = scmp.eq.s32.totalorder %s23, 1
      %p88 = por %p86, %p87
      %p90 = scmp.ne.s32.totalorder %s73, %s89
      %p91 = scmp.eq.s32.totalorder %s23, 0
      %p92 = por %p90, %p91
      %s93 = ssub.s32 %s24, %s36
      %p94 = scmp.eq.s32.totalorder %s93, 0
      %s96 = sadd.s32 %s95, 1
      %s97 = scalar_select %p94, %s95, %s96
      %p100 = pneg %p94
      %p101 = scmp.eq.s32.totalorder %s17, 1
      %p102 = por %p100, %p101
      %p103 = scmp.ne.s32.totalorder %s95, %s98
      %p104 = scmp.eq.s32.totalorder %s17, 0
      %p105 = por %p103, %p104
      %p106 = scmp.ne.s32.totalorder %s95, %s98
      %p107 = scmp.eq.s32.totalorder %s22, 1
      %p108 = por %p106, %p107
      %p109 = scmp.ne.s32.totalorder %s98, %s99
      %p110 = scmp.eq.s32.totalorder %s22, 0
      %p111 = por %p109, %p110
      %p112 = scmp.ne.s32.totalorder %s98, %s99
      %p113 = scmp.eq.s32.totalorder %s23, 1
      %p114 = por %p112, %p113
      %p116 = scmp.ne.s32.totalorder %s99, %s115
      %p117 = scmp.eq.s32.totalorder %s23, 0
      %p118 = por %p116, %p117
      %p119 = scmp.le.s32.totalorder 1, %s17
      %p120 = scmp.lt.s32.totalorder %s17, 3
      %p121 = pnand %p119, %p120
      %p122 = pneg %p121
      // Predicated region
      $region9: #{tpu_custom_call.1} parent=5 // pred_check
        _
      $region10: #{tpu_custom_call.1} parent=5 // pred_check_branch
        %124 = sbr.rel (%p121) target = $region12
      $region11: #{tpu_custom_call.1} parent=5 // pred_region
        %s125 = ssub.s32 %s17, 1
      $region12: #{tpu_custom_call.1} parent=5 // pred_fallthru
        _
      %p126 = scmp.lt.s32.totalorder %s17, 2
      // Predicated region
      $region13: #{tpu_custom_call.1} parent=5 // pred_check
        %p127 = pneg %p126
      $region14: #{tpu_custom_call.1} parent=5 // pred_check_branch
        %129 = sbr.rel (%p127) target = $region16
      $region15: #{tpu_custom_call.1} parent=5 // pred_region
        // Predicated region
        $region17: #{tpu_custom_call.1} parent=15 // pred_check
          %p130 = pneg %p51
        $region18: #{tpu_custom_call.1} parent=15 // pred_check_branch
          %132 = sbr.rel (%p130) target = $region20
        $region19: #{tpu_custom_call.1} parent=15 // pred_region
          %s133 = sand.u32 %s41, 1
          %s134 = scalar_lea.sflag [#allocation3], %s133
          %s135 = sand.u32 %s41, 1
          %s136 = smul.addr %s135, 8
          %s137 = scalar_lea.vmem [#allocation2], %s136
          %139 = vsyncadd %s134, 0
          %s140 = sadd.s32 %s25, %s24
          %s141 = smul.addr %s140, 8
          %s142 = scalar_lea.hbm %s0, %s141
          %s144 = sshll.u32 %s142, 4
          %s145 = int_to_ptr.hbm [resolvable:$true] %s144
          %s146 = sshll.u32 %s137, 4
          %s147 = int_to_ptr.vmem [resolvable:$true] %s146
          %149 = dma.hbm_to_vmem [thread:$0]  %s145, 128, %s147, %s134
        $region20: #{tpu_custom_call.1} parent=15 // pred_fallthru
          _
        // Predicated region
        $region21: #{tpu_custom_call.1} parent=15 // pred_check
          %p150 = pneg %p79
        $region22: #{tpu_custom_call.1} parent=15 // pred_check_branch
          %152 = sbr.rel (%p150) target = $region24
        $region23: #{tpu_custom_call.1} parent=15 // pred_region
          %s153 = sand.u32 %s69, 1
          %s154 = scalar_lea.sflag [#allocation6], %s153
          %s155 = sand.u32 %s69, 1
          %s156 = smul.addr %s155, 8
          %s157 = scalar_lea.vmem [#allocation5], %s156
          %159 = vsyncadd %s154, 0
          %s160 = sadd.s32 %s25, %s24
          %s161 = smul.addr %s160, 8
          %s162 = scalar_lea.hbm %s1, %s161
          %s164 = sshll.u32 %s162, 4
          %s165 = int_to_ptr.hbm [resolvable:$true] %s164
          %s166 = sshll.u32 %s157, 4
          %s167 = int_to_ptr.vmem [resolvable:$true] %s166
          %169 = dma.hbm_to_vmem [thread:$0]  %s165, 128, %s167, %s154
        $region24: #{tpu_custom_call.1} parent=15 // pred_fallthru
          _
      $region16: #{tpu_custom_call.1} parent=5 // pred_fallthru
        _
      %p170 = scmp.le.s32.totalorder 1, %s17
      %p171 = scmp.lt.s32.totalorder %s17, 3
      %p172 = pnand %p170, %p171
      %p173 = pneg %p172
      // Predicated region
      $region25: #{tpu_custom_call.1} parent=5 // pred_check
        _
      $region26: #{tpu_custom_call.1} parent=5 // pred_check_branch
        %175 = sbr.rel (%p172) target = $region28
      $region27: #{tpu_custom_call.1} parent=5 // pred_region
        %s176 = ssub.s32 %s17, 1
        %s177 = sand.u32 %s44, 1
        %s178 = scalar_lea.sflag [#allocation3], %s177
        %s179 = sand.u32 %s44, 1
        %s180 = smul.addr %s179, 8
        %s181 = scalar_lea.vmem [#allocation2], %s180
        // Predicated region
        $region29: #{tpu_custom_call.1} parent=27 // pred_check
          %p182 = pneg %p57
        $region30: #{tpu_custom_call.1} parent=27 // pred_check_branch
          %184 = sbr.rel (%p182) target = $region32
        $region31: #{tpu_custom_call.1} parent=27 // pred_region
          %186 = dma.done %s178, 128
        $region32: #{tpu_custom_call.1} parent=27 // pred_fallthru
          _
        %s187 = sand.u32 %s72, 1
        %s188 = scalar_lea.sflag [#allocation6], %s187
        %s189 = sand.u32 %s72, 1
        %s190 = smul.addr %s189, 8
        %s191 = scalar_lea.vmem [#allocation5], %s190
        // Predicated region
        $region33: #{tpu_custom_call.1} parent=27 // pred_check
          %p192 = pneg %p85
        $region34: #{tpu_custom_call.1} parent=27 // pred_check_branch
          %194 = sbr.rel (%p192) target = $region36
        $region35: #{tpu_custom_call.1} parent=27 // pred_region
          %196 = dma.done %s188, 128
        $region36: #{tpu_custom_call.1} parent=27 // pred_fallthru
          _
        %s197 = sand.u32 %s44, 1
        %s198 = scalar_lea.sflag [#allocation3], %s197
        %s199 = sand.u32 %s44, 1
        %s200 = smul.addr %s199, 8
        %s201 = scalar_lea.vmem [#allocation2], %s200
        %p202 = pneg %p57
        %p203 = pneg %p54
        %s204 = sand.u32 %s72, 1
        %s205 = scalar_lea.sflag [#allocation6], %s204
        %s206 = sand.u32 %s72, 1
        %s207 = smul.addr %s206, 8
        %s208 = scalar_lea.vmem [#allocation5], %s207
        %p209 = pneg %p85
        %p210 = pneg %p82
        %p211 = pneg %p111
        %p212 = pneg %p108
        %s213 = sand.u32 %s98, 1
        %s214 = scalar_lea.sflag [#allocation4], %s213
        %s215 = sand.u32 %s98, 1
        %s216 = smul.addr %s215, 8
        %s217 = scalar_lea.vmem [#allocation7], %s216
        %p218 = scmp.eq.s32.totalorder %s27, 0
        // Predicated region
        $region37: #{tpu_custom_call.1} parent=27 // pred_check
          %p219 = pneg %p218
        $region38: #{tpu_custom_call.1} parent=27 // pred_check_branch
          %221 = sbr.rel (%p219) target = $region40
        $region39: #{tpu_custom_call.1} parent=27 // pred_region
          %222 = vst [vmem:[%s217] sm:$0xff] 0.0
        $region40: #{tpu_custom_call.1} parent=27 // pred_fallthru
          _
        %v223 = vld [vmem:[%s191] sm:$0xff]
        %v224 = vld [vmem:[%s181] sm:$0xff]
        %v225 = vsub.f32 %v223, %v224
        %v226 = vand.u32 2147483647, %v225
        %v227 = vmul.f32 %v226, 0.5
        %v228 = vadd.f32 %v227, 1.0
        %v229 = vlog2.pop %v228
        %v230 = vmul.f32 %v229, 0.6931472
        %v231 = vmul.f32 -0.5, %v227
        %v232 = vadd.f32 %v231, 1.0
        %v233 = vmul.f32 %v232, %v227
        %v234 = vand.u32 2147483647, %v227
        %vm235 = vcmp.lt.f32.partialorder %v234, 0.0004427343
        %v236 = vsel %vm235, %v233, %v230
        %v237 = vmul.f32 %v236, 10.0
        %v238 = vsub.f32 %v226, -7.917595
        %vm239 = vcmp.lt.f32.partialorder %v226, 10.0
        %v240 = vsel %vm239, %v237, %v238
        %v241 = vld [vmem:[%s217] sm:$0xff]
        %v242 = vadd.f32 %v240, 0.0
        %v243 = vadd.f32 %v241, %v242
        %244 = vst [vmem:[%s217] sm:$0xff] %v243
        %s245 = sand.u32 %s98, 1
        %s246 = scalar_lea.sflag [#allocation4], %s245
        %s247 = sand.u32 %s98, 1
        %s248 = smul.addr %s247, 8
        %s249 = scalar_lea.vmem [#allocation7], %s248
        // Predicated region
        $region41: #{tpu_custom_call.1} parent=27 // pred_check
          %p250 = pneg %p108
        $region42: #{tpu_custom_call.1} parent=27 // pred_check_branch
          %252 = sbr.rel (%p250) target = $region44
        $region43: #{tpu_custom_call.1} parent=27 // pred_region
          %254 = vsyncadd %s246, 0
          %s255 = smul.addr %s26, 8
          %s256 = scalar_lea.hbm %s2, %s255
          %s258 = sshll.u32 %s249, 4
          %s259 = int_to_ptr.vmem [resolvable:$true] %s258
          %s260 = sshll.u32 %s256, 4
          %s261 = int_to_ptr.hbm [resolvable:$true] %s260
          %263 = dma.vmem_to_hbm [thread:$0]  %s259, 128, %s261, %s246
        $region44: #{tpu_custom_call.1} parent=27 // pred_fallthru
          _
      $region28: #{tpu_custom_call.1} parent=5 // pred_fallthru
        _
      %p264 = scmp.le.s32.totalorder 2, %s17
      // Predicated region
      $region45: #{tpu_custom_call.1} parent=5 // pred_check
        %p265 = pneg %p264
      $region46: #{tpu_custom_call.1} parent=5 // pred_check_branch
        %267 = sbr.rel (%p265) target = $region48
      $region47: #{tpu_custom_call.1} parent=5 // pred_region
        %s268 = ssub.s32 %s17, 2
        // Predicated region
        $region49: #{tpu_custom_call.1} parent=47 // pred_check
          %p269 = pneg %p114
        $region50: #{tpu_custom_call.1} parent=47 // pred_check_branch
          %271 = sbr.rel (%p269) target = $region52
        $region51: #{tpu_custom_call.1} parent=47 // pred_region
          %s272 = sand.u32 %s99, 1
          %s273 = scalar_lea.sflag [#allocation4], %s272
          %s274 = sand.u32 %s99, 1
          %s275 = smul.addr %s274, 8
          %s276 = scalar_lea.vmem [#allocation7], %s275
          %278 = dma.done %s273, 128
        $region52: #{tpu_custom_call.1} parent=47 // pred_fallthru
          _
      $region48: #{tpu_custom_call.1} parent=5 // pred_fallthru
        _
    $region6: #{tpu_custom_call.1} parent=1 // loop_footer
      %s21 = sadd.s32 1, %s17
    $region7: #{tpu_custom_call.1} parent=1 // loop_footer_branch
      %16 = sbr.rel target = $region3
    $region8: #{tpu_custom_call.1} parent=1 // loop_exit
      _
    %279 = vsyncpa [#allocation3], 1
    %s280 = scalar_lea.sflag [#allocation3], 1
    %281 = vsyncpa %s280, 1
    %282 = vsyncpa [#allocation6], 1
    %s283 = scalar_lea.sflag [#allocation6], 1
    %284 = vsyncpa %s283, 1
    %285 = vsyncpa [#allocation4], 1
    %s286 = scalar_lea.sflag [#allocation4], 1
    %287 = vsyncpa %s286, 1

</llo_original>
